<compile_context>
chip_gen: v7x
topology: tpu7x:2x2x1
jax: 0.10.0
libtpu: 0.0.40
codegen_flags: <defaults>
</compile_context>

<pallas_src>
import functools

import jax
import jax.numpy as jnp
from jax.experimental import pallas as pl
from jax.experimental.pallas import tpu as pltpu


# ----------------------------------------------------------------------------
# Kernels
# ----------------------------------------------------------------------------
def _moving_avg_sum_kernel(x_ref, o_ref, xp_ref, *, kernel_size, pad, out_len):
    """VALU path (stride == 1, small kernel_size).

    x_ref : (L, Nt) input lane tile
    o_ref : (out_len, Nt) output lane tile
    xp_ref: (L + 2*pad, Nt) VMEM scratch holding the replicate-padded tile
    """
    L, n = x_ref.shape

    # Edge replication entirely inside VMEM (no extra HBM round trip).
    xp_ref[pad:pad + L, :] = x_ref[...]
    if pad > 0:
        first = x_ref[0:1, :]
        last = x_ref[L - 1:L, :]
        xp_ref[0:pad, :] = jnp.broadcast_to(first, (pad, n))
        xp_ref[pad + L:pad + L + pad, :] = jnp.broadcast_to(last, (pad, n))

    # Accumulate from ref slices: one slice + the accumulator live at a time,
    # per-slice upcast to f32 (keeps vreg pressure low, bf16-friendly on v5e).
    acc = xp_ref[0:out_len, :].astype(jnp.float32)
    for k in range(1, kernel_size):
        acc = acc + xp_ref[k:k + out_len, :].astype(jnp.float32)
    o_ref[...] = (acc * (1.0 / kernel_size)).astype(o_ref.dtype)


def _moving_avg_mxu_kernel(a_ref, x_ref, o_ref):
    """MXU path: o = A @ x with padding + averaging folded into A.

    a_ref : (out_len, L) static banded averaging matrix (f32)
    x_ref : (L, Nt) input lane tile
    o_ref : (out_len, Nt) output lane tile
    """
    o_ref[...] = jnp.dot(
        a_ref[...],
        x_ref[...].astype(jnp.float32),
        preferred_element_type=jnp.float32,
        precision=jax.lax.Precision.HIGHEST,
    ).astype(o_ref.dtype)


# ----------------------------------------------------------------------------
# Wrapper
# ----------------------------------------------------------------------------
def _pick_lane_tile(n):
    """Largest lane tile (multiple of 128, <= 1024) that divides n, else full n."""
    for t in (1024, 512, 256, 128):
        if n % t == 0:
            return t
    return n


def _build_avg_matrix(L, kernel_size, stride, pad, out_len):
    """(out_len, L) matrix: A[t, j] = (#window taps of output t clamped to j) / K."""
    t = jnp.arange(out_len, dtype=jnp.int32)[:, None, None]
    i = jnp.arange(kernel_size, dtype=jnp.int32)[None, :, None]
    j = jnp.arange(L, dtype=jnp.int32)[None, None, :]
    src = jnp.clip(t * stride + i - pad, 0, L - 1)
    counts = (src == j).astype(jnp.float32).sum(axis=1)
    return counts * (1.0 / kernel_size)


def moving_avg(x, kernel_size, stride):
    """x: (B, L, C) -> (B, L_out, C), matching the PyTorch module."""
    B, L, C = x.shape
    pad = (kernel_size - 1) // 2
    Lp = L + 2 * pad
    out_len = (Lp - kernel_size) // stride + 1
    N = B * C

    # Lane-dense layout: time on sublanes, batch*channels on lanes (glue only).
    xt = jnp.transpose(x, (1, 0, 2)).reshape(L, N)

    lane_tile = _pick_lane_tile(N)
    grid = (N // lane_tile,)

    itemsize = jnp.dtype(x.dtype).itemsize
    cost = pl.CostEstimate(
        flops=int(B) * int(out_len) * int(C) * int(kernel_size),
        transcendentals=0,
        bytes_accessed=int((L * N + out_len * N) * itemsize),
    )
    cparams = pltpu.CompilerParams(dimension_semantics=("parallel",))

    use_mxu = (kernel_size >= 8) or (stride != 1)

    if use_mxu:
        A = _build_avg_matrix(L, kernel_size, stride, pad, out_len)
        out_t = pl.pallas_call(
            _moving_avg_mxu_kernel,
            out_shape=jax.ShapeDtypeStruct((out_len, N), x.dtype),
            grid=grid,
            in_specs=[
                pl.BlockSpec((out_len, L), lambda j: (0, 0)),
                pl.BlockSpec((L, lane_tile), lambda j: (0, j)),
            ],
            out_specs=pl.BlockSpec((out_len, lane_tile), lambda j: (0, j)),
            compiler_params=cparams,
            cost_estimate=cost,
        )(A, xt)
    else:
        kernel = functools.partial(
            _moving_avg_sum_kernel,
            kernel_size=kernel_size,
            pad=pad,
            out_len=out_len,
        )
        out_t = pl.pallas_call(
            kernel,
            out_shape=jax.ShapeDtypeStruct((out_len, N), x.dtype),
            grid=grid,
            in_specs=[pl.BlockSpec((L, lane_tile), lambda j: (0, j))],
            out_specs=pl.BlockSpec((out_len, lane_tile), lambda j: (0, j)),
            scratch_shapes=[pltpu.VMEM((Lp, lane_tile), x.dtype)],
            compiler_params=cparams,
            cost_estimate=cost,
        )(xt)

    # Back to (B, out_len, C) (layout glue).
    return jnp.transpose(out_t.reshape(out_len, B, C), (1, 0, 2))


# ----------------------------------------------------------------------------
# Pure-JAX reference mirroring the PyTorch forward
# ----------------------------------------------------------------------------
def _moving_avg_ref(x, kernel_size, stride):
    pad = (kernel_size - 1) // 2
    front = jnp.repeat(x[:, 0:1, :], pad, axis=1)
    end = jnp.repeat(x[:, -1:, :], pad, axis=1)
    xp = jnp.concatenate([front, x, end], axis=1)
    Lp = xp.shape[1]
    out_len = (Lp - kernel_size) // stride + 1
    outs = []
    for t in range(out_len):
        outs.append(jnp.mean(xp[:, t * stride:t * stride + kernel_size, :], axis=1))
    return jnp.stack(outs, axis=1)


if __name__ == "__main__":
    key = jax.random.PRNGKey(0)
    B, L, C = 2, 16, 8
    x = jax.random.normal(key, (B, L, C), dtype=jnp.float32)

    # (kernel_size, stride): small-K VALU path, large-K MXU path, strided MXU path.
    configs = [(5, 1), (25, 1), (4, 2)]
    for kernel_size, stride in configs:
        out = jax.block_until_ready(moving_avg(x, kernel_size, stride))
        ref = _moving_avg_ref(x, kernel_size, stride)
        assert out.shape == ref.shape, (kernel_size, stride, out.shape, ref.shape)
        assert jnp.allclose(out, ref, atol=1e-5, rtol=1e-5), (
            f"mismatch vs reference for kernel_size={kernel_size}, stride={stride}"
        )

    print("KERNEL_OK")
</pallas_src>

<mosaic_0001>
module attributes {stable_mosaic.version = 11 : i64} {
  func.func @_moving_avg_sum_kernel(%arg0: i32, %arg1: memref<16x16xf32, #tpu.memory_space<vmem>>, %arg2: memref<16x16xf32, #tpu.memory_space<vmem>>, %arg3: memref<20x16xf32, #tpu.memory_space<vmem>>) attributes {dimension_semantics = [#tpu.dimension_semantics<parallel>], iteration_bounds = array<i64: 1>, scalar_prefetch = 0 : i64, scratch_operands = 1 : i64, tpu.core_type = #tpu.core_type<tc>, window_params = [{transform_indices = @transform_0, window_bounds = array<i64: 16, 16>}, {transform_indices = @transform_1, window_bounds = array<i64: 16, 16>}]} {
    %c0 = arith.constant 0 : index
    %c0_0 = arith.constant 0 : index
    %0 = vector.load %arg1[%c0, %c0_0] : memref<16x16xf32, #tpu.memory_space<vmem>>, vector<16x16xf32>
    %c2 = arith.constant 2 : index
    %c0_1 = arith.constant 0 : index
    %1 = vector.load %arg3[%c2, %c0_1] : memref<20x16xf32, #tpu.memory_space<vmem>>, vector<16x16xf32>
    tpu.vector_store %arg3[%c2, %c0_1], %0 {strides = array<i32>} : memref<20x16xf32, #tpu.memory_space<vmem>>, vector<16x16xf32>,
    %c0_2 = arith.constant 0 : index
    %c0_3 = arith.constant 0 : index
    %2 = vector.load %arg1[%c0_2, %c0_3] : memref<16x16xf32, #tpu.memory_space<vmem>>, vector<1x16xf32>
    %c15 = arith.constant 15 : index
    %c0_4 = arith.constant 0 : index
    %3 = vector.load %arg1[%c15, %c0_4] : memref<16x16xf32, #tpu.memory_space<vmem>>, vector<1x16xf32>
    %4 = vector.shape_cast %2 : vector<1x16xf32> to vector<1x16xf32>
    %5 = vector.broadcast %4 : vector<1x16xf32> to vector<2x16xf32>
    %c0_5 = arith.constant 0 : index
    %c0_6 = arith.constant 0 : index
    %6 = vector.load %arg3[%c0_5, %c0_6] : memref<20x16xf32, #tpu.memory_space<vmem>>, vector<2x16xf32>
    tpu.vector_store %arg3[%c0_5, %c0_6], %5 {strides = array<i32>} : memref<20x16xf32, #tpu.memory_space<vmem>>, vector<2x16xf32>,
    %7 = vector.shape_cast %3 : vector<1x16xf32> to vector<1x16xf32>
    %8 = vector.broadcast %7 : vector<1x16xf32> to vector<2x16xf32>
    %c18 = arith.constant 18 : index
    %c0_7 = arith.constant 0 : index
    %9 = vector.load %arg3[%c18, %c0_7] : memref<20x16xf32, #tpu.memory_space<vmem>>, vector<2x16xf32>
    tpu.vector_store %arg3[%c18, %c0_7], %8 {strides = array<i32>} : memref<20x16xf32, #tpu.memory_space<vmem>>, vector<2x16xf32>,
    %c0_8 = arith.constant 0 : index
    %c0_9 = arith.constant 0 : index
    %10 = vector.load %arg3[%c0_8, %c0_9] : memref<20x16xf32, #tpu.memory_space<vmem>>, vector<16x16xf32>
    %c1 = arith.constant 1 : index
    %c0_10 = arith.constant 0 : index
    %11 = vector.load %arg3[%c1, %c0_10] : memref<20x16xf32, #tpu.memory_space<vmem>>, vector<16x16xf32>
    %12 = arith.addf %10, %11 : vector<16x16xf32>
    %c2_11 = arith.constant 2 : index
    %c0_12 = arith.constant 0 : index
    %13 = vector.load %arg3[%c2_11, %c0_12] : memref<20x16xf32, #tpu.memory_space<vmem>>, vector<16x16xf32>
    %14 = arith.addf %12, %13 : vector<16x16xf32>
    %c3 = arith.constant 3 : index
    %c0_13 = arith.constant 0 : index
    %15 = vector.load %arg3[%c3, %c0_13] : memref<20x16xf32, #tpu.memory_space<vmem>>, vector<16x16xf32>
    %16 = arith.addf %14, %15 : vector<16x16xf32>
    %c4 = arith.constant 4 : index
    %c0_14 = arith.constant 0 : index
    %17 = vector.load %arg3[%c4, %c0_14] : memref<20x16xf32, #tpu.memory_space<vmem>>, vector<16x16xf32>
    %18 = arith.addf %16, %17 : vector<16x16xf32>
    %cst = arith.constant 2.000000e-01 : f32
    %19 = vector.broadcast %cst : f32 to vector<16x16xf32>
    %20 = arith.mulf %18, %19 : vector<16x16xf32>
    %c0_15 = arith.constant 0 : index
    %c0_16 = arith.constant 0 : index
    %21 = vector.load %arg2[%c0_15, %c0_16] : memref<16x16xf32, #tpu.memory_space<vmem>>, vector<16x16xf32>
    tpu.vector_store %arg2[%c0_15, %c0_16], %20 {strides = array<i32>} : memref<16x16xf32, #tpu.memory_space<vmem>>, vector<16x16xf32>,
    return
  }
  func.func @transform_0(%arg0: i32) -> (i32, i32) {
    %c0_i32 = arith.constant 0 : i32
    %c0_i32_0 = arith.constant 0 : i32
    return %c0_i32, %arg0 : i32, i32
  }
  func.func @transform_1(%arg0: i32) -> (i32, i32) {
    %c0_i32 = arith.constant 0 : i32
    %c0_i32_0 = arith.constant 0 : i32
    return %c0_i32, %arg0 : i32, i32
  }
}

</mosaic_0001>

<llo_original>
// kernel: tpu_custom_call.1
$region0: #{tpu_custom_call.1}
  #allocation0 [shape = 'u32[]', space=smem, size = 0x4, offset = 0x4, fixed_abs, tag = 'smem constant byte address 0x4 - core index']
  #allocation1 [shape = 'u32[144,128]{1,0:T(1,128)}', space=vmem, size = 0x12000, scoped, tag = 'internal scratch']
  #allocation2 [shape = 'f32[20,16]{1,0:T(8,128)}', space=vmem, size = 0x3000, scoped, tag = 'scratch operand']
  %s0 = inlined_call_operand.hbm [shape: f32[16,16], index: 0, kind: input, shape index: {}]
  %s1 = inlined_call_operand.hbm [shape: f32[16,16], index: 1, kind: output, shape index: {}]
  %s2 = sld [smem:[#allocation0]]
  $region18: #{tpu_custom_call.1} parent=0
    _
  %s4 = ssub.s32 1, %s2
  %s5 = scalar_select 0, %s4, %s2
  $region1: #{tpu_custom_call.1} parent=0
    #allocation3 [shape = 'u8[8192]{0}', space=vmem, size = 0x2000, scoped, tag = 'input window, operand 0, single buffered']
    #allocation4 [shape = 's32[1]{0}', space=sflag, size = 0x4, scoped, tag = 'scoped memory for tpu_custom_call.1']
    #allocation5 [shape = 's32[1]{0}', space=sflag, size = 0x4, scoped, tag = 'scoped memory for tpu_custom_call.1']
    #allocation6 [shape = 'u8[8192]{0}', space=vmem, size = 0x2000, scoped, tag = 'output window, operand 0, single buffered']
    %6 = vsyncpa [#allocation4], 0
    %7 = vsyncpa [#allocation5], 0
    // Predicated region
    $region2: #{tpu_custom_call.1} parent=1 // pred_check
      _
    $region3: #{tpu_custom_call.1} parent=1 // pred_check_branch
      %9 = sbr.rel (0) target = $region5
    $region4: #{tpu_custom_call.1} parent=1 // pred_region
      %s11 = ssub.s32 256, 256
      %12 = vsyncadd [#allocation4], %s11
      %s13 = sshll.u32 [#allocation3], 4
      %s14 = int_to_ptr.vmem [resolvable:$true] %s13
      %19 = dma.hbm_to_vmem [thread:$0]  %s0, 256, %s14, [#allocation4], 128, 128, 8
    $region5: #{tpu_custom_call.1} parent=1 // pred_fallthru
      _
    // Predicated region
    $region6: #{tpu_custom_call.1} parent=1 // pred_check
      _
    $region7: #{tpu_custom_call.1} parent=1 // pred_check_branch
      %21 = sbr.rel (0) target = $region9
    $region8: #{tpu_custom_call.1} parent=1 // pred_region
      %22 = dma.done [#allocation4], 256
    $region9: #{tpu_custom_call.1} parent=1 // pred_fallthru
      _
    %v23 = vld [vmem:[#allocation3] sm:$0xff]
    %v24 = vld [vmem:[#allocation3 + $0x8] sm:$0xff]
    %vm25 = vcmask 130048
    %26 = vst.msk [vmem:[#allocation2 + $0x2] sm:$0xff] %vm25, %v23
    %27 = vst.msk [vmem:[#allocation2 + $0xa] sm:$0xff] %vm25, %v24
    %v28 = vld [vmem:[#allocation3] sm:$0x1]
    %v29 = vld [vmem:[#allocation3 + $0xf] sm:$0x1]
    %v30 = vlaneseq
    %v31 = vshrl.u32 %v30, 7
    %v32 = vsub.s32 0, %v31
    %v33 = vrot.slane %v28, %v32
    %vm34 = vcmask 123904
    %35 = vst.msk [vmem:[#allocation2] sm:$0x3] %vm34, %v33
    %v36 = vlaneseq
    %v37 = vshrl.u32 %v36, 7
    %v38 = vsub.s32 0, %v37
    %v39 = vrot.slane %v29, %v38
    %40 = vst.msk [vmem:[#allocation2 + $0x12] sm:$0x3] %vm34, %v39
    %v41 = vld [vmem:[#allocation2] sm:$0xff]
    %v42 = vld [vmem:[#allocation2 + $0x8] sm:$0xff]
    %v43 = vld [vmem:[#allocation2 + $0x1] sm:$0xff]
    %v44 = vld [vmem:[#allocation2 + $0x9] sm:$0xff]
    %v45 = vadd.f32 %v41, %v43
    %v46 = vadd.f32 %v42, %v44
    %v47 = vld [vmem:[#allocation2 + $0x2] sm:$0xff]
    %v48 = vld [vmem:[#allocation2 + $0xa] sm:$0xff]
    %v49 = vadd.f32 %v45, %v47
    %v50 = vadd.f32 %v46, %v48
    %v51 = vld [vmem:[#allocation2 + $0x3] sm:$0xff]
    %v52 = vld [vmem:[#allocation2 + $0xb] sm:$0xff]
    %v53 = vadd.f32 %v49, %v51
    %v54 = vadd.f32 %v50, %v52
    %v55 = vld [vmem:[#allocation2 + $0x4] sm:$0xff]
    %v56 = vld [vmem:[#allocation2 + $0xc] sm:$0xff]
    %v57 = vadd.f32 %v53, %v55
    %v58 = vadd.f32 %v54, %v56
    %v59 = vmul.f32 %v57, 0.2
    %v60 = vmul.f32 %v58, 0.2
    %61 = vst.msk [vmem:[#allocation6] sm:$0xff] %vm25, %v59
    %62 = vst.msk [vmem:[#allocation6 + $0x8] sm:$0xff] %vm25, %v60
    // Predicated region
    $region10: #{tpu_custom_call.1} parent=1 // pred_check
      _
    $region11: #{tpu_custom_call.1} parent=1 // pred_check_branch
      %64 = sbr.rel (0) target = $region13
    $region12: #{tpu_custom_call.1} parent=1 // pred_region
      %s66 = ssub.s32 256, 256
      %67 = vsyncadd [#allocation5], %s66
      %s68 = sshll.u32 [#allocation6], 4
      %s69 = int_to_ptr.vmem [resolvable:$true] %s68
      %74 = dma.vmem_to_hbm [thread:$0]  %s69, 256, %s1, [#allocation5], 128, 128, 8
    $region13: #{tpu_custom_call.1} parent=1 // pred_fallthru
      _
    // Predicated region
    $region14: #{tpu_custom_call.1} parent=1 // pred_check
      _
    $region15: #{tpu_custom_call.1} parent=1 // pred_check_branch
      %76 = sbr.rel (0) target = $region17
    $region16: #{tpu_custom_call.1} parent=1 // pred_region
      %77 = dma.done [#allocation5], 256
    $region17: #{tpu_custom_call.1} parent=1 // pred_fallthru
      _
    %78 = vsyncpa [#allocation4], 1
    %79 = vsyncpa [#allocation5], 1

</llo_original>
